<compile_context>
chip_gen: v7x
topology: tpu7x:2x2x1
jax: 0.10.0
libtpu: 0.0.40
codegen_flags: <defaults>
</compile_context>

<pallas_src>
import functools

import jax
import jax.numpy as jnp
import numpy as np
from jax.experimental import pallas as pl
from jax.experimental.pallas import tpu as pltpu

NUM_CHANNELS = 8
KSIZE = 5
PAD = 2
BN_EPS = 1e-5


def _bridge_kernel(xe_ref, w1_ref, g1_ref, be1_ref, w2_ref, g2_ref, be2_ref,
                   o_ref, *, n_batch, seq_len):
    C, We = xe_ref.shape
    L = seq_len
    Lp = L + 2 * PAD
    Wp = n_batch * Lp              # working (padded-merged) lane width
    inv_count = 1.0 / float(n_batch * L)   # BN normalizer: valid columns only

    # Valid-column mask (1, Wp): 1.0 on real data columns, 0.0 on the per-batch
    # padding columns.  Built once (hoisted) and reused by both BN layers.
    q = jax.lax.broadcasted_iota(jnp.int32, (1, Wp), 1)
    mask = jnp.zeros((1, Wp), jnp.float32)
    for n in range(n_batch):                      # static, tiny
        lo = n * Lp + PAD
        mask = mask + ((q >= lo) & (q < lo + L)).astype(jnp.float32)

    def conv_im2col(xe, w_ref):
        # xe: (C, Wp + 2*PAD) f32 slab (global edges zero-padded).
        # im2col: stack the K shifted lane-slices along the sublane axis and do
        # a single MXU matmul (C, K*C) @ (K*C, Wp), bf16 operands, f32 accum.
        stacked = jnp.concatenate([xe[:, k:k + Wp] for k in range(KSIZE)],
                                  axis=0)                          # (K*C, Wp)
        return jnp.dot(w_ref[...], stacked.astype(jnp.bfloat16),
                       preferred_element_type=jnp.float32)          # (C, Wp)

    def bn_relu(y, g, be):
        # Training-mode BN over (N, L): one-pass masked stats + fused affine.
        ym = y * mask
        s1 = jnp.sum(ym, axis=1, keepdims=True)
        s2 = jnp.sum(ym * ym, axis=1, keepdims=True)
        mean = s1 * inv_count
        var = s2 * inv_count - mean * mean
        scale = g * jax.lax.rsqrt(var + BN_EPS)
        shift = be - scale * mean
        # Re-apply the mask so padding columns stay exactly zero (they act as
        # the per-batch zero padding for the following conv).
        return jnp.maximum(y * scale + shift, 0.0) * mask

    zeros_edge = jnp.zeros((C, PAD), jnp.float32)

    a1 = bn_relu(conv_im2col(xe_ref[...], w1_ref), g1_ref[...], be1_ref[...])
    a1e = jnp.concatenate([zeros_edge, a1, zeros_edge], axis=1)     # (C, We)
    a2 = bn_relu(conv_im2col(a1e, w2_ref), g2_ref[...], be2_ref[...])

    o_ref[...] = a2          # single lane-dense store of the whole slab


def bridge_pallas(x, params):
    """x: (N, C, L) float32 (PyTorch NCW). params: PyTorch-shaped parameters."""
    N, C, L = x.shape
    Lp = L + 2 * PAD

    # --- layout plumbing (outside the kernel, free) ---
    xp = jnp.pad(x, ((0, 0), (0, 0), (PAD, PAD)))                   # (N, C, Lp)
    xpm = jnp.transpose(xp, (1, 0, 2)).reshape(C, N * Lp)           # (C, N*Lp)
    xe = jnp.pad(xpm, ((0, 0), (PAD, PAD)))                         # (C, N*Lp+2*PAD)

    def wflat(w):   # (C_out, C_in, K) -> (C_out, K*C_in) im2col weight, bf16
        return jnp.transpose(w, (0, 2, 1)).reshape(C, KSIZE * C).astype(jnp.bfloat16)

    col = lambda v: v.reshape(C, 1).astype(jnp.float32)

    # NOTE: conv biases b1/b2 are intentionally NOT passed -- training-mode
    # BatchNorm subtracts the batch mean right after each conv, which cancels a
    # per-channel constant bias exactly (mathematically identical output).
    args = (xe,
            wflat(params["w1"]), col(params["g1"]), col(params["be1"]),
            wflat(params["w2"]), col(params["g2"]), col(params["be2"]))

    vmem = pl.BlockSpec(memory_space=pltpu.MemorySpace.VMEM)
    out = pl.pallas_call(
        functools.partial(_bridge_kernel, n_batch=N, seq_len=L),
        out_shape=jax.ShapeDtypeStruct((C, N * Lp), jnp.float32),
        in_specs=[vmem] * len(args),
        out_specs=vmem,
    )(*args)
    # TODO(synk): at production sizes (large N*L) this needs a two-pass, gridded
    # pipeline (BlockSpec index_maps + dimension_semantics=("parallel",)) so it
    # pipelines HBM<->VMEM and uses both TensorCores on v7x; BN batch stats make
    # that a two-phase kernel, unnecessary at these tiny shapes.
    return out.reshape(C, N, Lp)[:, :, PAD:PAD + L].transpose(1, 0, 2)


def bridge_reference(x, params):
    """Pure-JAX reference of the PyTorch forward (for correctness check)."""
    def conv(xin, w, b):
        xpad = jnp.pad(xin, ((0, 0), (0, 0), (PAD, PAD)))
        L = xin.shape[2]
        out = jnp.zeros_like(xin)
        for k in range(KSIZE):
            out = out + jnp.einsum("oc,ncl->nol", w[:, :, k], xpad[:, :, k:k + L])
        return out + b[None, :, None]

    def bn_relu(y, g, be):
        mean = y.mean(axis=(0, 2), keepdims=True)
        var = ((y - mean) ** 2).mean(axis=(0, 2), keepdims=True)
        norm = (y - mean) / jnp.sqrt(var + BN_EPS)
        return jnp.maximum(g[None, :, None] * norm + be[None, :, None], 0.0)

    a1 = bn_relu(conv(x, params["w1"], params["b1"]), params["g1"], params["be1"])
    a2 = bn_relu(conv(a1, params["w2"], params["b2"]), params["g2"], params["be2"])
    return a2


def make_params(key, C):
    ks = jax.random.split(key, 8)
    scale = 1.0 / np.sqrt(C * KSIZE)   # roughly PyTorch's fan-in scale
    return {
        "w1": scale * jax.random.normal(ks[0], (C, C, KSIZE), jnp.float32),
        "b1": scale * jax.random.normal(ks[1], (C,), jnp.float32),
        "g1": 1.0 + 0.1 * jax.random.normal(ks[2], (C,), jnp.float32),
        "be1": 0.1 * jax.random.normal(ks[3], (C,), jnp.float32),
        "w2": scale * jax.random.normal(ks[4], (C, C, KSIZE), jnp.float32),
        "b2": scale * jax.random.normal(ks[5], (C,), jnp.float32),
        "g2": 1.0 + 0.1 * jax.random.normal(ks[6], (C,), jnp.float32),
        "be2": 0.1 * jax.random.normal(ks[7], (C,), jnp.float32),
    }


if __name__ == "__main__":
    # Small shapes consistent with the module: cf=4 -> C = num_channels*cf = 32.
    N, cf, L = 2, 4, 16
    C = NUM_CHANNELS * cf

    key = jax.random.PRNGKey(0)
    kx, kp = jax.random.split(key)
    x = jax.random.normal(kx, (N, C, L), jnp.float32)
    params = make_params(kp, C)

    out = jax.block_until_ready(bridge_pallas(x, params))
    ref = jax.block_until_ready(bridge_reference(x, params))

    np.testing.assert_allclose(np.asarray(out), np.asarray(ref),
                               rtol=5e-2, atol=5e-2)
    print("KERNEL_OK")
</pallas_src>

<mosaic_0001>
module attributes {stable_mosaic.version = 11 : i64} {
  func.func @_bridge_kernel(%arg0: memref<32x44xf32, #tpu.memory_space<vmem>>, %arg1: memref<32x160xbf16, #tpu.memory_space<vmem>>, %arg2: memref<32x1xf32, #tpu.memory_space<vmem>>, %arg3: memref<32x1xf32, #tpu.memory_space<vmem>>, %arg4: memref<32x160xbf16, #tpu.memory_space<vmem>>, %arg5: memref<32x1xf32, #tpu.memory_space<vmem>>, %arg6: memref<32x1xf32, #tpu.memory_space<vmem>>, %arg7: memref<32x40xf32, #tpu.memory_space<vmem>>) attributes {dimension_semantics = [], scalar_prefetch = 0 : i64, scratch_operands = 0 : i64, tpu.core_type = #tpu.core_type<tc>} {
    %0 = tpu.iota {dimensions = array<i32: 1>} : vector<1x40xi32>
    %cst = arith.constant 0.000000e+00 : f32
    %1 = vector.broadcast %cst : f32 to vector<1x40xf32>
    %c2_i32 = arith.constant 2 : i32
    %2 = vector.broadcast %c2_i32 : i32 to vector<1x40xi32>
    %3 = arith.cmpi sge, %0, %2 : vector<1x40xi32>
    %c18_i32 = arith.constant 18 : i32
    %4 = vector.broadcast %c18_i32 : i32 to vector<1x40xi32>
    %5 = arith.cmpi slt, %0, %4 : vector<1x40xi32>
    %6 = arith.andi %3, %5 : vector<1x40xi1>
    %7 = arith.extui %6 : vector<1x40xi1> to vector<1x40xi32>
    %8 = arith.sitofp %7 : vector<1x40xi32> to vector<1x40xf32>
    %9 = arith.addf %1, %8 : vector<1x40xf32>
    %c22_i32 = arith.constant 22 : i32
    %10 = vector.broadcast %c22_i32 : i32 to vector<1x40xi32>
    %11 = arith.cmpi sge, %0, %10 : vector<1x40xi32>
    %c38_i32 = arith.constant 38 : i32
    %12 = vector.broadcast %c38_i32 : i32 to vector<1x40xi32>
    %13 = arith.cmpi slt, %0, %12 : vector<1x40xi32>
    %14 = arith.andi %11, %13 : vector<1x40xi1>
    %15 = arith.extui %14 : vector<1x40xi1> to vector<1x40xi32>
    %16 = arith.sitofp %15 : vector<1x40xi32> to vector<1x40xf32>
    %17 = arith.addf %9, %16 : vector<1x40xf32>
    %cst_0 = arith.constant 0.000000e+00 : f32
    %18 = vector.broadcast %cst_0 : f32 to vector<32x2xf32>
    %c0 = arith.constant 0 : index
    %c0_1 = arith.constant 0 : index
    %19 = vector.load %arg0[%c0, %c0_1] : memref<32x44xf32, #tpu.memory_space<vmem>>, vector<32x44xf32>
    %20 = vector.extract_strided_slice %19 {offsets = [0, 0], sizes = [32, 40], strides = [1, 1]} : vector<32x44xf32> to vector<32x40xf32>
    %21 = vector.extract_strided_slice %19 {offsets = [0, 1], sizes = [32, 40], strides = [1, 1]} : vector<32x44xf32> to vector<32x40xf32>
    %22 = vector.extract_strided_slice %19 {offsets = [0, 2], sizes = [32, 40], strides = [1, 1]} : vector<32x44xf32> to vector<32x40xf32>
    %23 = vector.extract_strided_slice %19 {offsets = [0, 3], sizes = [32, 40], strides = [1, 1]} : vector<32x44xf32> to vector<32x40xf32>
    %24 = vector.extract_strided_slice %19 {offsets = [0, 4], sizes = [32, 40], strides = [1, 1]} : vector<32x44xf32> to vector<32x40xf32>
    %25 = tpu.concatenate %20, %21, %22, %23, %24 in 0 : vector<32x40xf32>, vector<32x40xf32>, vector<32x40xf32>, vector<32x40xf32>, vector<32x40xf32> -> vector<160x40xf32>
    %c0_2 = arith.constant 0 : index
    %c0_3 = arith.constant 0 : index
    %26 = vector.load %arg1[%c0_2, %c0_3] : memref<32x160xbf16, #tpu.memory_space<vmem>>, vector<32x160xbf16>
    %27 = arith.truncf %25 : vector<160x40xf32> to vector<160x40xbf16>
    %cst_4 = arith.constant dense<0.000000e+00> : vector<32x40xf32>
    %28 = tpu.matmul %26, %27, %cst_4 {dimension_numbers = #tpu.dot_dimension_numbers<[1], [0], [0], [1], [0, 0, 1, 1], [], []>} : vector<32x160xbf16>, vector<160x40xbf16>, vector<32x40xf32> -> vector<32x40xf32>
    %c0_5 = arith.constant 0 : index
    %c0_6 = arith.constant 0 : index
    %29 = vector.load %arg2[%c0_5, %c0_6] : memref<32x1xf32, #tpu.memory_space<vmem>>, vector<32x1xf32>
    %c0_7 = arith.constant 0 : index
    %c0_8 = arith.constant 0 : index
    %30 = vector.load %arg3[%c0_7, %c0_8] : memref<32x1xf32, #tpu.memory_space<vmem>>, vector<32x1xf32>
    %31 = vector.broadcast %17 : vector<1x40xf32> to vector<32x40xf32>
    %32 = arith.mulf %28, %31 : vector<32x40xf32>
    %cst_9 = arith.constant dense<0.000000e+00> : vector<32xf32>
    %33 = vector.multi_reduction <add>, %32, %cst_9 [1] : vector<32x40xf32> to vector<32xf32>
    %34 = vector.shape_cast %33 : vector<32xf32> to vector<32x1xf32>
    %35 = arith.mulf %32, %32 : vector<32x40xf32>
    %cst_10 = arith.constant dense<0.000000e+00> : vector<32xf32>
    %36 = vector.multi_reduction <add>, %35, %cst_10 [1] : vector<32x40xf32> to vector<32xf32>
    %37 = vector.shape_cast %36 : vector<32xf32> to vector<32x1xf32>
    %cst_11 = arith.constant 3.125000e-02 : f32
    %38 = vector.broadcast %cst_11 : f32 to vector<32x1xf32>
    %39 = arith.mulf %34, %38 : vector<32x1xf32>
    %cst_12 = arith.constant 3.125000e-02 : f32
    %40 = vector.broadcast %cst_12 : f32 to vector<32x1xf32>
    %41 = arith.mulf %37, %40 : vector<32x1xf32>
    %42 = arith.mulf %39, %39 : vector<32x1xf32>
    %43 = arith.subf %41, %42 : vector<32x1xf32>
    %cst_13 = arith.constant 9.99999974E-6 : f32
    %44 = vector.broadcast %cst_13 : f32 to vector<32x1xf32>
    %45 = arith.addf %43, %44 : vector<32x1xf32>
    %46 = math.rsqrt %45 : vector<32x1xf32>
    %47 = arith.mulf %29, %46 : vector<32x1xf32>
    %48 = arith.mulf %47, %39 : vector<32x1xf32>
    %49 = arith.subf %30, %48 : vector<32x1xf32>
    %50 = vector.broadcast %47 : vector<32x1xf32> to vector<32x40xf32>
    %51 = arith.mulf %28, %50 : vector<32x40xf32>
    %52 = vector.broadcast %49 : vector<32x1xf32> to vector<32x40xf32>
    %53 = arith.addf %51, %52 : vector<32x40xf32>
    %cst_14 = arith.constant 0.000000e+00 : f32
    %54 = vector.broadcast %cst_14 : f32 to vector<32x40xf32>
    %55 = arith.maximumf %53, %54 : vector<32x40xf32>
    %56 = vector.broadcast %17 : vector<1x40xf32> to vector<32x40xf32>
    %57 = arith.mulf %55, %56 : vector<32x40xf32>
    %58 = tpu.concatenate %18, %57, %18 in 1 : vector<32x2xf32>, vector<32x40xf32>, vector<32x2xf32> -> vector<32x44xf32>
    %59 = vector.extract_strided_slice %58 {offsets = [0, 0], sizes = [32, 40], strides = [1, 1]} : vector<32x44xf32> to vector<32x40xf32>
    %60 = vector.extract_strided_slice %58 {offsets = [0, 1], sizes = [32, 40], strides = [1, 1]} : vector<32x44xf32> to vector<32x40xf32>
    %61 = vector.extract_strided_slice %58 {offsets = [0, 2], sizes = [32, 40], strides = [1, 1]} : vector<32x44xf32> to vector<32x40xf32>
    %62 = vector.extract_strided_slice %58 {offsets = [0, 3], sizes = [32, 40], strides = [1, 1]} : vector<32x44xf32> to vector<32x40xf32>
    %63 = vector.extract_strided_slice %58 {offsets = [0, 4], sizes = [32, 40], strides = [1, 1]} : vector<32x44xf32> to vector<32x40xf32>
    %64 = tpu.concatenate %59, %60, %61, %62, %63 in 0 : vector<32x40xf32>, vector<32x40xf32>, vector<32x40xf32>, vector<32x40xf32>, vector<32x40xf32> -> vector<160x40xf32>
    %c0_15 = arith.constant 0 : index
    %c0_16 = arith.constant 0 : index
    %65 = vector.load %arg4[%c0_15, %c0_16] : memref<32x160xbf16, #tpu.memory_space<vmem>>, vector<32x160xbf16>
    %66 = arith.truncf %64 : vector<160x40xf32> to vector<160x40xbf16>
    %cst_17 = arith.constant dense<0.000000e+00> : vector<32x40xf32>
    %67 = tpu.matmul %65, %66, %cst_17 {dimension_numbers = #tpu.dot_dimension_numbers<[1], [0], [0], [1], [0, 0, 1, 1], [], []>} : vector<32x160xbf16>, vector<160x40xbf16>, vector<32x40xf32> -> vector<32x40xf32>
    %c0_18 = arith.constant 0 : index
    %c0_19 = arith.constant 0 : index
    %68 = vector.load %arg5[%c0_18, %c0_19] : memref<32x1xf32, #tpu.memory_space<vmem>>, vector<32x1xf32>
    %c0_20 = arith.constant 0 : index
    %c0_21 = arith.constant 0 : index
    %69 = vector.load %arg6[%c0_20, %c0_21] : memref<32x1xf32, #tpu.memory_space<vmem>>, vector<32x1xf32>
    %70 = vector.broadcast %17 : vector<1x40xf32> to vector<32x40xf32>
    %71 = arith.mulf %67, %70 : vector<32x40xf32>
    %cst_22 = arith.constant dense<0.000000e+00> : vector<32xf32>
    %72 = vector.multi_reduction <add>, %71, %cst_22 [1] : vector<32x40xf32> to vector<32xf32>
    %73 = vector.shape_cast %72 : vector<32xf32> to vector<32x1xf32>
    %74 = arith.mulf %71, %71 : vector<32x40xf32>
    %cst_23 = arith.constant dense<0.000000e+00> : vector<32xf32>
    %75 = vector.multi_reduction <add>, %74, %cst_23 [1] : vector<32x40xf32> to vector<32xf32>
    %76 = vector.shape_cast %75 : vector<32xf32> to vector<32x1xf32>
    %cst_24 = arith.constant 3.125000e-02 : f32
    %77 = vector.broadcast %cst_24 : f32 to vector<32x1xf32>
    %78 = arith.mulf %73, %77 : vector<32x1xf32>
    %cst_25 = arith.constant 3.125000e-02 : f32
    %79 = vector.broadcast %cst_25 : f32 to vector<32x1xf32>
    %80 = arith.mulf %76, %79 : vector<32x1xf32>
    %81 = arith.mulf %78, %78 : vector<32x1xf32>
    %82 = arith.subf %80, %81 : vector<32x1xf32>
    %cst_26 = arith.constant 9.99999974E-6 : f32
    %83 = vector.broadcast %cst_26 : f32 to vector<32x1xf32>
    %84 = arith.addf %82, %83 : vector<32x1xf32>
    %85 = math.rsqrt %84 : vector<32x1xf32>
    %86 = arith.mulf %68, %85 : vector<32x1xf32>
    %87 = arith.mulf %86, %78 : vector<32x1xf32>
    %88 = arith.subf %69, %87 : vector<32x1xf32>
    %89 = vector.broadcast %86 : vector<32x1xf32> to vector<32x40xf32>
    %90 = arith.mulf %67, %89 : vector<32x40xf32>
    %91 = vector.broadcast %88 : vector<32x1xf32> to vector<32x40xf32>
    %92 = arith.addf %90, %91 : vector<32x40xf32>
    %cst_27 = arith.constant 0.000000e+00 : f32
    %93 = vector.broadcast %cst_27 : f32 to vector<32x40xf32>
    %94 = arith.maximumf %92, %93 : vector<32x40xf32>
    %95 = vector.broadcast %17 : vector<1x40xf32> to vector<32x40xf32>
    %96 = arith.mulf %94, %95 : vector<32x40xf32>
    %c0_28 = arith.constant 0 : index
    %c0_29 = arith.constant 0 : index
    %97 = vector.load %arg7[%c0_28, %c0_29] : memref<32x40xf32, #tpu.memory_space<vmem>>, vector<32x40xf32>
    tpu.vector_store %arg7[%c0_28, %c0_29], %96 {strides = array<i32>} : memref<32x40xf32, #tpu.memory_space<vmem>>, vector<32x40xf32>,
    return
  }
}

</mosaic_0001>

<llo_original>
// kernel: tpu_custom_call.1
$region0: #{tpu_custom_call.1}
  #allocation0 [shape = 'u32[]', space=smem, size = 0x4, offset = 0x4, fixed_abs, tag = 'smem constant byte address 0x4 - core index']
  #allocation1 [shape = 'u32[144,128]{1,0:T(1,128)}', space=vmem, size = 0x12000, scoped, tag = 'internal scratch']
  %s0 = inlined_call_operand.vmem [shape: f32[32,44], index: 0, kind: input, shape index: {}]
  %s1 = inlined_call_operand.vmem [shape: bf16[32,160], index: 1, kind: input, shape index: {}]
  %s2 = inlined_call_operand.vmem [shape: f32[32,1], index: 2, kind: input, shape index: {}]
  %s3 = inlined_call_operand.vmem [shape: f32[32,1], index: 3, kind: input, shape index: {}]
  %s4 = inlined_call_operand.vmem [shape: bf16[32,160], index: 4, kind: input, shape index: {}]
  %s5 = inlined_call_operand.vmem [shape: f32[32,1], index: 5, kind: input, shape index: {}]
  %s6 = inlined_call_operand.vmem [shape: f32[32,1], index: 6, kind: input, shape index: {}]
  %s7 = inlined_call_operand.hbm [shape: f32[32,40], index: 7, kind: output, shape index: {}]
  %s8 = sld [smem:[#allocation0]]
  $region38: #{tpu_custom_call.1} parent=0
    _
  %s10 = ssub.s32 1, %s8
  %s11 = scalar_select 0, %s10, %s8
  $region1: #{tpu_custom_call.1} parent=0
    #allocation2 [shape = 'u8[16384]{0}', space=vmem, size = 0x4000, scoped, tag = 'output window, operand 0, single buffered']
    #allocation3 [shape = 's32[1]{0}', space=sflag, size = 0x4, scoped, tag = 'scoped memory for tpu_custom_call.1']
    %12 = vsyncpa [#allocation3], 0
    // Predicated region
    $region2: #{tpu_custom_call.1} parent=1 // pred_check
      _
    $region3: #{tpu_custom_call.1} parent=1 // pred_check_branch
      %14 = sbr.rel (0) target = $region5
    $region4: #{tpu_custom_call.1} parent=1 // pred_region
      _
    $region5: #{tpu_custom_call.1} parent=1 // pred_fallthru
      _
    // Predicated region
    $region6: #{tpu_custom_call.1} parent=1 // pred_check
      _
    $region7: #{tpu_custom_call.1} parent=1 // pred_check_branch
      %16 = sbr.rel (0) target = $region9
    $region8: #{tpu_custom_call.1} parent=1 // pred_region
      _
    $region9: #{tpu_custom_call.1} parent=1 // pred_fallthru
      _
    // Predicated region
    $region10: #{tpu_custom_call.1} parent=1 // pred_check
      _
    $region11: #{tpu_custom_call.1} parent=1 // pred_check_branch
      %18 = sbr.rel (0) target = $region13
    $region12: #{tpu_custom_call.1} parent=1 // pred_region
      _
    $region13: #{tpu_custom_call.1} parent=1 // pred_fallthru
      _
    // Predicated region
    $region14: #{tpu_custom_call.1} parent=1 // pred_check
      _
    $region15: #{tpu_custom_call.1} parent=1 // pred_check_branch
      %20 = sbr.rel (0) target = $region17
    $region16: #{tpu_custom_call.1} parent=1 // pred_region
      _
    $region17: #{tpu_custom_call.1} parent=1 // pred_fallthru
      _
    // Predicated region
    $region18: #{tpu_custom_call.1} parent=1 // pred_check
      _
    $region19: #{tpu_custom_call.1} parent=1 // pred_check_branch
      %22 = sbr.rel (0) target = $region21
    $region20: #{tpu_custom_call.1} parent=1 // pred_region
      _
    $region21: #{tpu_custom_call.1} parent=1 // pred_fallthru
      _
    // Predicated region
    $region22: #{tpu_custom_call.1} parent=1 // pred_check
      _
    $region23: #{tpu_custom_call.1} parent=1 // pred_check_branch
      %24 = sbr.rel (0) target = $region25
    $region24: #{tpu_custom_call.1} parent=1 // pred_region
      _
    $region25: #{tpu_custom_call.1} parent=1 // pred_fallthru
      _
    // Predicated region
    $region26: #{tpu_custom_call.1} parent=1 // pred_check
      _
    $region27: #{tpu_custom_call.1} parent=1 // pred_check_branch
      %26 = sbr.rel (0) target = $region29
    $region28: #{tpu_custom_call.1} parent=1 // pred_region
      _
    $region29: #{tpu_custom_call.1} parent=1 // pred_fallthru
      _
    %v28 = vlaneseq
    %v29 = vand.u32 %v28, 127
    %vm30 = vcmp.ge.s32.totalorder %v29, 2
    %vm31 = vcmp.lt.s32.totalorder %v29, 18
    %vm32 = vmand %vm30, %vm31
    %v33 = vsel %vm32, 1, 0
    %v34 = vcvt.s32.f32 %v33
    %v35 = vadd.f32 %v34, 0.0
    %vm36 = vcmp.ge.s32.totalorder %v29, 22
    %vm37 = vcmp.lt.s32.totalorder %v29, 38
    %vm38 = vmand %vm36, %vm37
    %v39 = vsel %vm38, 1, 0
    %v40 = vcvt.s32.f32 %v39
    %v41 = vadd.f32 %v35, %v40
    %v42 = vld [vmem:[%s0] sm:$0xff]
    %v43 = vld [vmem:[%s0 + $0x8] sm:$0xff]
    %v44 = vld [vmem:[%s0 + $0x10] sm:$0xff]
    %v45 = vld [vmem:[%s0 + $0x18] sm:$0xff]
    %50 = vrot.lane.b32.xlu0 %v42, 127
    %v51 = vpop.permute.xlu0 %50
    %52 = vrot.lane.b32.xlu0 %v43, 127
    %v53 = vpop.permute.xlu0 %52
    %54 = vrot.lane.b32.xlu0 %v44, 127
    %v55 = vpop.permute.xlu0 %54
    %56 = vrot.lane.b32.xlu0 %v45, 127
    %v57 = vpop.permute.xlu0 %56
    %62 = vrot.lane.b32.xlu0 %v42, 126
    %v63 = vpop.permute.xlu0 %62
    %64 = vrot.lane.b32.xlu0 %v43, 126
    %v65 = vpop.permute.xlu0 %64
    %66 = vrot.lane.b32.xlu0 %v44, 126
    %v67 = vpop.permute.xlu0 %66
    %68 = vrot.lane.b32.xlu0 %v45, 126
    %v69 = vpop.permute.xlu0 %68
    %74 = vrot.lane.b32.xlu0 %v42, 125
    %v75 = vpop.permute.xlu0 %74
    %76 = vrot.lane.b32.xlu0 %v43, 125
    %v77 = vpop.permute.xlu0 %76
    %78 = vrot.lane.b32.xlu0 %v44, 125
    %v79 = vpop.permute.xlu0 %78
    %80 = vrot.lane.b32.xlu0 %v45, 125
    %v81 = vpop.permute.xlu0 %80
    %86 = vrot.lane.b32.xlu0 %v42, 124
    %v87 = vpop.permute.xlu0 %86
    %88 = vrot.lane.b32.xlu0 %v43, 124
    %v89 = vpop.permute.xlu0 %88
    %90 = vrot.lane.b32.xlu0 %v44, 124
    %v91 = vpop.permute.xlu0 %90
    %92 = vrot.lane.b32.xlu0 %v45, 124
    %v93 = vpop.permute.xlu0 %92
    %v98 = vld [vmem:[%s1] sm:$0xff]
    %v99 = vld [vmem:[%s1 + $0x8] sm:$0xff]
    %v100 = vld [vmem:[%s1 + $0x10] sm:$0xff]
    %v101 = vld [vmem:[%s1 + $0x18] sm:$0xff]
    %v102 = vpack.c.bf16 %v43, %v42
    %v103 = vpack.c.bf16 %v45, %v44
    %v104 = vpack.c.bf16 %v53, %v51
    %v105 = vpack.c.bf16 %v57, %v55
    %v106 = vpack.c.bf16 %v65, %v63
    %v107 = vpack.c.bf16 %v69, %v67
    %v108 = vpack.c.bf16 %v77, %v75
    %v109 = vpack.c.bf16 %v81, %v79
    %v110 = vpack.c.bf16 %v89, %v87
    %v111 = vpack.c.bf16 %v93, %v91
    %v116 = vunpack.c.l.b16 %v98
    %v117 = vunpack.c.h.b16 %v98
    %v118 = vunpack.c.l.b16 %v99
    %v119 = vunpack.c.h.b16 %v99
    %v120 = vunpack.c.l.b16 %v100
    %v121 = vunpack.c.h.b16 %v100
    %v122 = vunpack.c.l.b16 %v101
    %v123 = vunpack.c.h.b16 %v101
    %v124 = vpack.c.b16 %v118, %v116
    %v125 = vpack.c.b16 %v119, %v117
    %v126 = vpack.c.b16 %v122, %v120
    %v127 = vpack.c.b16 %v123, %v121
    %vm130 = vcmask 261120
    %v132 = vsel %vm130, %v125, 0
    %v135 = vsel %vm130, %v127, 0
    %137 = vmatprep.subr.bf16.mxu0 0
    %138 = vmatpush1.bf16.msra.mxu0 %v102
    %139 = vmatprep.subr.bf16.mxu0 0
    %140 = vmatpush1.bf16.msra.mxu0 %v103
    %141 = vmatprep.subr.bf16.mxu0 0
    %142 = vmatpush1.bf16.msra.mxu0 %v104
    %143 = vmatprep.subr.bf16.mxu0 0
    %144 = vmatpush1.bf16.msra.mxu0 %v105
    %145 = vmatprep.subr.bf16.mxu0 0
    %146 = vmatpush1.bf16.msra.mxu0 %v106
    %147 = vmatprep.subr.bf16.mxu0 0
    %148 = vmatpush1.bf16.msra.mxu0 %v107
    %149 = vmatprep.subr.bf16.mxu0 0
    %150 = vmatpush1.bf16.msra.mxu0 %v108
    %151 = vmatprep.subr.bf16.mxu0 0
    %152 = vmatpush1.bf16.msra.mxu0 %v109
    %153 = vmatprep.subr.bf16.mxu0 0
    %154 = vmatpush1.bf16.msra.mxu0 %v110
    %155 = vmatprep.subr.bf16.mxu0 0
    %156 = vmatpush1.bf16.msra.mxu0 %v111
    %157 = vmatprep.subr.bf16.mxu0 0
    %158 = vmatpush1.bf16.msra.mxu0 0
    %159 = vmatprep.subr.bf16.mxu0 0
    %160 = vmatpush1.bf16.msra.mxu0 0
    %161 = vmatprep.subr.bf16.mxu0 0
    %162 = vmatpush1.bf16.msra.mxu0 0
    %163 = vmatprep.subr.bf16.mxu0 0
    %164 = vmatpush1.bf16.msra.mxu0 0
    %165 = vmatprep.subr.bf16.mxu0 0
    %166 = vmatpush1.bf16.msra.mxu0 0
    %167 = vmatprep.subr.bf16.mxu0 0
    %168 = vmatpush1.bf16.msra.mxu0 0
    %169 = vmatprep.mubr.bf16.mxu0 %v132
    %170 = vmatmul.mubr.bf16.gmra.mrb[0].mxu0 %v124
    %v171 = vpop.f32.mrb[0].mxu0
    %v172 = vadd.f32 0.0, %v171
    %v173 = vpop.f32.mrb[0].mxu0
    %v174 = vpop.f32.mrb[0].mxu0
    %v175 = vadd.f32 0.0, %v174
    %v176 = vpop.f32.mrb[0].mxu0
    %177 = vmatprep.mubr.bf16.mxu0 %v135
    %178 = vmatmul.mubr.bf16.gmra.mrb[0].mxu0 %v126
    %v179 = vpop.f32.mrb[0].mxu0
    %v180 = vadd.f32 0.0, %v179
    %v181 = vpop.f32.mrb[0].mxu0
    %v182 = vpop.f32.mrb[0].mxu0
    %v183 = vadd.f32 0.0, %v182
    %v184 = vpop.f32.mrb[0].mxu0
    %185 = vdwg.mxu0
    %v186 = vld [vmem:[%s2] sm:$0xff]
    %v187 = vld [vmem:[%s2 + $0x8] sm:$0xff]
    %v188 = vld [vmem:[%s2 + $0x10] sm:$0xff]
    %v189 = vld [vmem:[%s2 + $0x18] sm:$0xff]
    %v190 = vld [vmem:[%s3] sm:$0xff]
    %v191 = vld [vmem:[%s3 + $0x8] sm:$0xff]
    %v192 = vld [vmem:[%s3 + $0x10] sm:$0xff]
    %v193 = vld [vmem:[%s3 + $0x18] sm:$0xff]
    %v194 = vmul.f32 %v172, %v41
    %v195 = vmul.f32 %v175, %v41
    %v196 = vmul.f32 %v180, %v41
    %v197 = vmul.f32 %v183, %v41
    %vm198 = vcmask 326656
    %v199 = vsel %vm198, %v194, 0.0
    %200 = vadd.xlane.f32.xlu0 %v199
    %v201 = vpop.xlane.xlu0 %200
    %v202 = vsel %vm198, %v195, 0.0
    %203 = vadd.xlane.f32.xlu0 %v202
    %v204 = vpop.xlane.xlu0 %203
    %v205 = vsel %vm198, %v196, 0.0
    %206 = vadd.xlane.f32.xlu0 %v205
    %v207 = vpop.xlane.xlu0 %206
    %v208 = vsel %vm198, %v197, 0.0
    %209 = vadd.xlane.f32.xlu0 %v208
    %v210 = vpop.xlane.xlu0 %209
    %v211 = vmul.f32 %v194, %v194
    %v212 = vmul.f32 %v195, %v195
    %v213 = vmul.f32 %v196, %v196
    %v214 = vmul.f32 %v197, %v197
    %v215 = vsel %vm198, %v211, 0.0
    %216 = vadd.xlane.f32.xlu0 %v215
    %v217 = vpop.xlane.xlu0 %216
    %v218 = vsel %vm198, %v212, 0.0
    %219 = vadd.xlane.f32.xlu0 %v218
    %v220 = vpop.xlane.xlu0 %219
    %v221 = vsel %vm198, %v213, 0.0
    %222 = vadd.xlane.f32.xlu0 %v221
    %v223 = vpop.xlane.xlu0 %222
    %v224 = vsel %vm198, %v214, 0.0
    %225 = vadd.xlane.f32.xlu0 %v224
    %v226 = vpop.xlane.xlu0 %225
    %v227 = vmul.f32 %v201, 0.03125
    %v228 = vmul.f32 %v204, 0.03125
    %v229 = vmul.f32 %v207, 0.03125
    %v230 = vmul.f32 %v210, 0.03125
    %v231 = vmul.f32 %v217, 0.03125
    %v232 = vmul.f32 %v220, 0.03125
    %v233 = vmul.f32 %v223, 0.03125
    %v234 = vmul.f32 %v226, 0.03125
    %v235 = vmul.f32 %v227, %v227
    %v236 = vmul.f32 %v228, %v228
    %v237 = vmul.f32 %v229, %v229
    %v238 = vmul.f32 %v230, %v230
    %v239 = vsub.f32 %v231, %v235
    %v240 = vsub.f32 %v232, %v236
    %v241 = vsub.f32 %v233, %v237
    %v242 = vsub.f32 %v234, %v238
    %v243 = vadd.f32 %v239, 1e-05
    %v244 = vadd.f32 %v240, 1e-05
    %v245 = vadd.f32 %v241, 1e-05
    %v246 = vadd.f32 %v242, 1e-05
    %v247 = vrsqrt.pop %v243
    %v248 = vrsqrt.pop %v244
    %v249 = vrsqrt.pop %v245
    %v250 = vrsqrt.pop %v246
    %v251 = vmul.f32 %v186, %v247
    %v252 = vmul.f32 %v187, %v248
    %v253 = vmul.f32 %v188, %v249
    %v254 = vmul.f32 %v189, %v250
    %v255 = vmul.f32 %v251, %v227
    %v256 = vmul.f32 %v252, %v228
    %v257 = vmul.f32 %v253, %v229
    %v258 = vmul.f32 %v254, %v230
    %v259 = vsub.f32 %v190, %v255
    %v260 = vsub.f32 %v191, %v256
    %v261 = vsub.f32 %v192, %v257
    %v262 = vsub.f32 %v193, %v258
    %264 = vset.pattern.permute.xlu0 0
    %265 = vperm.xlu0 %264, %v251
    %v266 = vpop.permute.xlu0 %265
    %269 = vset.pattern.permute.xlu0 0
    %270 = vperm.xlu0 %269, %v252
    %v271 = vpop.permute.xlu0 %270
    %274 = vset.pattern.permute.xlu0 0
    %275 = vperm.xlu0 %274, %v253
    %v276 = vpop.permute.xlu0 %275
    %279 = vset.pattern.permute.xlu0 0
    %280 = vperm.xlu0 %279, %v254
    %v281 = vpop.permute.xlu0 %280
    %v283 = vmul.f32 %v172, %v266
    %v284 = vmul.f32 %v175, %v271
    %v285 = vmul.f32 %v180, %v276
    %v286 = vmul.f32 %v183, %v281
    %288 = vset.pattern.permute.xlu0 0
    %289 = vperm.xlu0 %288, %v259
    %v290 = vpop.permute.xlu0 %289
    %293 = vset.pattern.permute.xlu0 0
    %294 = vperm.xlu0 %293, %v260
    %v295 = vpop.permute.xlu0 %294
    %298 = vset.pattern.permute.xlu0 0
    %299 = vperm.xlu0 %298, %v261
    %v300 = vpop.permute.xlu0 %299
    %303 = vset.pattern.permute.xlu0 0
    %304 = vperm.xlu0 %303, %v262
    %v305 = vpop.permute.xlu0 %304
    %v307 = vadd.f32 %v283, %v290
    %v308 = vadd.f32 %v284, %v295
    %v309 = vadd.f32 %v285, %v300
    %v310 = vadd.f32 %v286, %v305
    %v311 = vmax.f32 %v307, 0.0
    %v312 = vmax.f32 %v308, 0.0
    %v313 = vmax.f32 %v309, 0.0
    %v314 = vmax.f32 %v310, 0.0
    %v315 = vmul.f32 %v311, %v41
    %v316 = vmul.f32 %v312, %v41
    %v317 = vmul.f32 %v313, %v41
    %v318 = vmul.f32 %v314, %v41
    %323 = vrot.lane.b32.xlu0 %v315, 2
    %v324 = vpop.permute.xlu0 %323
    %325 = vrot.lane.b32.xlu0 %v316, 2
    %v326 = vpop.permute.xlu0 %325
    %327 = vrot.lane.b32.xlu0 %v317, 2
    %v328 = vpop.permute.xlu0 %327
    %329 = vrot.lane.b32.xlu0 %v318, 2
    %v330 = vpop.permute.xlu0 %329
    %vm335 = vcmask 15360
    %v336 = vsel %vm335, 0.0, %v324
    %v337 = vsel %vm335, 0.0, %v326
    %v338 = vsel %vm335, 0.0, %v328
    %v339 = vsel %vm335, 0.0, %v330
    %vm340 = vcmask 343040
    %v341 = vsel %vm340, %v336, 0.0
    %v342 = vsel %vm340, %v337, 0.0
    %v343 = vsel %vm340, %v338, 0.0
    %v344 = vsel %vm340, %v339, 0.0
    %349 = vrot.lane.b32.xlu0 %v341, 127
    %v350 = vpop.permute.xlu0 %349
    %351 = vrot.lane.b32.xlu0 %v342, 127
    %v352 = vpop.permute.xlu0 %351
    %353 = vrot.lane.b32.xlu0 %v343, 127
    %v354 = vpop.permute.xlu0 %353
    %355 = vrot.lane.b32.xlu0 %v344, 127
    %v356 = vpop.permute.xlu0 %355
    %361 = vrot.lane.b32.xlu0 %v341, 126
    %v362 = vpop.permute.xlu0 %361
    %363 = vrot.lane.b32.xlu0 %v342, 126
    %v364 = vpop.permute.xlu0 %363
    %365 = vrot.lane.b32.xlu0 %v343, 126
    %v366 = vpop.permute.xlu0 %365
    %367 = vrot.lane.b32.xlu0 %v344, 126
    %v368 = vpop.permute.xlu0 %367
    %373 = vrot.lane.b32.xlu0 %v341, 125
    %v374 = vpop.permute.xlu0 %373
    %375 = vrot.lane.b32.xlu0 %v342, 125
    %v376 = vpop.permute.xlu0 %375
    %377 = vrot.lane.b32.xlu0 %v343, 125
    %v378 = vpop.permute.xlu0 %377
    %379 = vrot.lane.b32.xlu0 %v344, 125
    %v380 = vpop.permute.xlu0 %379
    %385 = vrot.lane.b32.xlu0 %v341, 124
    %v386 = vpop.permute.xlu0 %385
    %387 = vrot.lane.b32.xlu0 %v342, 124
    %v388 = vpop.permute.xlu0 %387
    %389 = vrot.lane.b32.xlu0 %v343, 124
    %v390 = vpop.permute.xlu0 %389
    %391 = vrot.lane.b32.xlu0 %v344, 124
    %v392 = vpop.permute.xlu0 %391
    %v397 = vld [vmem:[%s4] sm:$0xff]
    %v398 = vld [vmem:[%s4 + $0x8] sm:$0xff]
    %v399 = vld [vmem:[%s4 + $0x10] sm:$0xff]
    %v400 = vld [vmem:[%s4 + $0x18] sm:$0xff]
    %v401 = vpack.c.bf16 %v342, %v341
    %v402 = vpack.c.bf16 %v344, %v343
    %v403 = vpack.c.bf16 %v352, %v350
    %v404 = vpack.c.bf16 %v356, %v354
    %v405 = vpack.c.bf16 %v364, %v362
    %v406 = vpack.c.bf16 %v368, %v366
    %v407 = vpack.c.bf16 %v376, %v374
    %v408 = vpack.c.bf16 %v380, %v378
    %v409 = vpack.c.bf16 %v388, %v386
    %v410 = vpack.c.bf16 %v392, %v390
    %v415 = vunpack.c.l.b16 %v397
    %v416 = vunpack.c.h.b16 %v397
    %v417 = vunpack.c.l.b16 %v398
    %v418 = vunpack.c.h.b16 %v398
    %v419 = vunpack.c.l.b16 %v399
    %v420 = vunpack.c.h.b16 %v399
    %v421 = vunpack.c.l.b16 %v400
    %v422 = vunpack.c.h.b16 %v400
    %v423 = vpack.c.b16 %v417, %v415
    %v424 = vpack.c.b16 %v418, %v416
    %v425 = vpack.c.b16 %v421, %v419
    %v426 = vpack.c.b16 %v422, %v420
    %v430 = vsel %vm130, %v424, 0
    %v433 = vsel %vm130, %v426, 0
    %435 = vmatprep.subr.bf16.mxu0 0
    %436 = vmatpush1.bf16.msra.mxu0 %v401
    %437 = vmatprep.subr.bf16.mxu0 0
    %438 = vmatpush1.bf16.msra.mxu0 %v402
    %439 = vmatprep.subr.bf16.mxu0 0
    %440 = vmatpush1.bf16.msra.mxu0 %v403
    %441 = vmatprep.subr.bf16.mxu0 0
    %442 = vmatpush1.bf16.msra.mxu0 %v404
    %443 = vmatprep.subr.bf16.mxu0 0
    %444 = vmatpush1.bf16.msra.mxu0 %v405
    %445 = vmatprep.subr.bf16.mxu0 0
    %446 = vmatpush1.bf16.msra.mxu0 %v406
    %447 = vmatprep.subr.bf16.mxu0 0
    %448 = vmatpush1.bf16.msra.mxu0 %v407
    %449 = vmatprep.subr.bf16.mxu0 0
    %450 = vmatpush1.bf16.msra.mxu0 %v408
    %451 = vmatprep.subr.bf16.mxu0 0
    %452 = vmatpush1.bf16.msra.mxu0 %v409
    %453 = vmatprep.subr.bf16.mxu0 0
    %454 = vmatpush1.bf16.msra.mxu0 %v410
    %455 = vmatprep.subr.bf16.mxu0 0
    %456 = vmatpush1.bf16.msra.mxu0 0
    %457 = vmatprep.subr.bf16.mxu0 0
    %458 = vmatpush1.bf16.msra.mxu0 0
    %459 = vmatprep.subr.bf16.mxu0 0
    %460 = vmatpush1.bf16.msra.mxu0 0
    %461 = vmatprep.subr.bf16.mxu0 0
    %462 = vmatpush1.bf16.msra.mxu0 0
    %463 = vmatprep.subr.bf16.mxu0 0
    %464 = vmatpush1.bf16.msra.mxu0 0
    %465 = vmatprep.subr.bf16.mxu0 0
    %466 = vmatpush1.bf16.msra.mxu0 0
    %467 = vmatprep.mubr.bf16.mxu0 %v430
    %468 = vmatmul.mubr.bf16.gmra.mrb[0].mxu0 %v423
    %v469 = vpop.f32.mrb[0].mxu0
    %v470 = vadd.f32 0.0, %v469
    %v471 = vpop.f32.mrb[0].mxu0
    %v472 = vpop.f32.mrb[0].mxu0
    %v473 = vadd.f32 0.0, %v472
    %v474 = vpop.f32.mrb[0].mxu0
    %475 = vmatprep.mubr.bf16.mxu0 %v433
    %476 = vmatmul.mubr.bf16.gmra.mrb[0].mxu0 %v425
    %v477 = vpop.f32.mrb[0].mxu0
    %v478 = vadd.f32 0.0, %v477
    %v479 = vpop.f32.mrb[0].mxu0
    %v480 = vpop.f32.mrb[0].mxu0
    %v481 = vadd.f32 0.0, %v480
    %v482 = vpop.f32.mrb[0].mxu0
    %483 = vdwg.mxu0
    %v484 = vld [vmem:[%s5] sm:$0xff]
    %v485 = vld [vmem:[%s5 + $0x8] sm:$0xff]
    %v486 = vld [vmem:[%s5 + $0x10] sm:$0xff]
    %v487 = vld [vmem:[%s5 + $0x18] sm:$0xff]
    %v488 = vld [vmem:[%s6] sm:$0xff]
    %v489 = vld [vmem:[%s6 + $0x8] sm:$0xff]
    %v490 = vld [vmem:[%s6 + $0x10] sm:$0xff]
    %v491 = vld [vmem:[%s6 + $0x18] sm:$0xff]
    %v492 = vmul.f32 %v470, %v41
    %v493 = vmul.f32 %v473, %v41
    %v494 = vmul.f32 %v478, %v41
    %v495 = vmul.f32 %v481, %v41
    %v496 = vsel %vm198, %v492, 0.0
    %497 = vadd.xlane.f32.xlu0 %v496
    %v498 = vpop.xlane.xlu0 %497
    %v499 = vsel %vm198, %v493, 0.0
    %500 = vadd.xlane.f32.xlu0 %v499
    %v501 = vpop.xlane.xlu0 %500
    %v502 = vsel %vm198, %v494, 0.0
    %503 = vadd.xlane.f32.xlu0 %v502
    %v504 = vpop.xlane.xlu0 %503
    %v505 = vsel %vm198, %v495, 0.0
    %506 = vadd.xlane.f32.xlu0 %v505
    %v507 = vpop.xlane.xlu0 %506
    %v508 = vmul.f32 %v492, %v492
    %v509 = vmul.f32 %v493, %v493
    %v510 = vmul.f32 %v494, %v494
    %v511 = vmul.f32 %v495, %v495
    %v512 = vsel %vm198, %v508, 0.0
    %513 = vadd.xlane.f32.xlu0 %v512
    %v514 = vpop.xlane.xlu0 %513
    %v515 = vsel %vm198, %v509, 0.0
    %516 = vadd.xlane.f32.xlu0 %v515
    %v517 = vpop.xlane.xlu0 %516
    %v518 = vsel %vm198, %v510, 0.0
    %519 = vadd.xlane.f32.xlu0 %v518
    %v520 = vpop.xlane.xlu0 %519
    %v521 = vsel %vm198, %v511, 0.0
    %522 = vadd.xlane.f32.xlu0 %v521
    %v523 = vpop.xlane.xlu0 %522
    %v524 = vmul.f32 %v498, 0.03125
    %v525 = vmul.f32 %v501, 0.03125
    %v526 = vmul.f32 %v504, 0.03125
    %v527 = vmul.f32 %v507, 0.03125
    %v528 = vmul.f32 %v514, 0.03125
    %v529 = vmul.f32 %v517, 0.03125
    %v530 = vmul.f32 %v520, 0.03125
    %v531 = vmul.f32 %v523, 0.03125
    %v532 = vmul.f32 %v524, %v524
    %v533 = vmul.f32 %v525, %v525
    %v534 = vmul.f32 %v526, %v526
    %v535 = vmul.f32 %v527, %v527
    %v536 = vsub.f32 %v528, %v532
    %v537 = vsub.f32 %v529, %v533
    %v538 = vsub.f32 %v530, %v534
    %v539 = vsub.f32 %v531, %v535
    %v540 = vadd.f32 %v536, 1e-05
    %v541 = vadd.f32 %v537, 1e-05
    %v542 = vadd.f32 %v538, 1e-05
    %v543 = vadd.f32 %v539, 1e-05
    %v544 = vrsqrt.pop %v540
    %v545 = vrsqrt.pop %v541
    %v546 = vrsqrt.pop %v542
    %v547 = vrsqrt.pop %v543
    %v548 = vmul.f32 %v484, %v544
    %v549 = vmul.f32 %v485, %v545
    %v550 = vmul.f32 %v486, %v546
    %v551 = vmul.f32 %v487, %v547
    %v552 = vmul.f32 %v548, %v524
    %v553 = vmul.f32 %v549, %v525
    %v554 = vmul.f32 %v550, %v526
    %v555 = vmul.f32 %v551, %v527
    %v556 = vsub.f32 %v488, %v552
    %v557 = vsub.f32 %v489, %v553
    %v558 = vsub.f32 %v490, %v554
    %v559 = vsub.f32 %v491, %v555
    %561 = vset.pattern.permute.xlu0 0
    %562 = vperm.xlu0 %561, %v548
    %v563 = vpop.permute.xlu0 %562
    %566 = vset.pattern.permute.xlu0 0
    %567 = vperm.xlu0 %566, %v549
    %v568 = vpop.permute.xlu0 %567
    %571 = vset.pattern.permute.xlu0 0
    %572 = vperm.xlu0 %571, %v550
    %v573 = vpop.permute.xlu0 %572
    %576 = vset.pattern.permute.xlu0 0
    %577 = vperm.xlu0 %576, %v551
    %v578 = vpop.permute.xlu0 %577
    %v580 = vmul.f32 %v470, %v563
    %v581 = vmul.f32 %v473, %v568
    %v582 = vmul.f32 %v478, %v573
    %v583 = vmul.f32 %v481, %v578
    %585 = vset.pattern.permute.xlu0 0
    %586 = vperm.xlu0 %585, %v556
    %v587 = vpop.permute.xlu0 %586
    %590 = vset.pattern.permute.xlu0 0
    %591 = vperm.xlu0 %590, %v557
    %v592 = vpop.permute.xlu0 %591
    %595 = vset.pattern.permute.xlu0 0
    %596 = vperm.xlu0 %595, %v558
    %v597 = vpop.permute.xlu0 %596
    %600 = vset.pattern.permute.xlu0 0
    %601 = vperm.xlu0 %600, %v559
    %v602 = vpop.permute.xlu0 %601
    %v604 = vadd.f32 %v580, %v587
    %v605 = vadd.f32 %v581, %v592
    %v606 = vadd.f32 %v582, %v597
    %v607 = vadd.f32 %v583, %v602
    %v608 = vmax.f32 %v604, 0.0
    %v609 = vmax.f32 %v605, 0.0
    %v610 = vmax.f32 %v606, 0.0
    %v611 = vmax.f32 %v607, 0.0
    %v612 = vmul.f32 %v608, %v41
    %v613 = vmul.f32 %v609, %v41
    %v614 = vmul.f32 %v610, %v41
    %v615 = vmul.f32 %v611, %v41
    %616 = vst.msk [vmem:[#allocation2] sm:$0xff] %vm198, %v612
    %617 = vst.msk [vmem:[#allocation2 + $0x8] sm:$0xff] %vm198, %v613
    %618 = vst.msk [vmem:[#allocation2 + $0x10] sm:$0xff] %vm198, %v614
    %619 = vst.msk [vmem:[#allocation2 + $0x18] sm:$0xff] %vm198, %v615
    // Predicated region
    $region30: #{tpu_custom_call.1} parent=1 // pred_check
      _
    $region31: #{tpu_custom_call.1} parent=1 // pred_check_branch
      %621 = sbr.rel (0) target = $region33
    $region32: #{tpu_custom_call.1} parent=1 // pred_region
      %s623 = ssub.s32 512, 512
      %624 = vsyncadd [#allocation3], %s623
      %s625 = sshll.u32 [#allocation2], 4
      %s626 = int_to_ptr.vmem [resolvable:$true] %s625
      %631 = dma.vmem_to_hbm [thread:$0]  %s626, 512, %s7, [#allocation3], 128, 128, 8
    $region33: #{tpu_custom_call.1} parent=1 // pred_fallthru
      _
    // Predicated region
    $region34: #{tpu_custom_call.1} parent=1 // pred_check
      _
    $region35: #{tpu_custom_call.1} parent=1 // pred_check_branch
      %633 = sbr.rel (0) target = $region37
    $region36: #{tpu_custom_call.1} parent=1 // pred_region
      %634 = dma.done [#allocation3], 512
    $region37: #{tpu_custom_call.1} parent=1 // pred_fallthru
      _
    %635 = vsyncpa [#allocation3], 1

</llo_original>
